<compile_context>
chip_gen: v6e
topology: v6e:2x2x1
jax: 0.10.0
libtpu: 0.0.40
codegen_flags: <defaults>
</compile_context>

<pallas_src>
import jax
import jax.numpy as jnp
from jax.experimental import pallas as pl
from jax.experimental.pallas import tpu as pltpu


def probe_kernel(mix_ref, scalar_ref, cls_ref, w1_ref, b1_ref, w2_ref, b2_ref, o_ref):
    # mix_ref:    (L+1,)           SMEM scalars
    # scalar_ref: (1,)             SMEM scalar
    # cls_ref:    (TB, L+1, D_in)  VMEM tile (pipelined over the batch grid)
    # w1_ref:     (D_in, H), b1_ref: (1, H)          VMEM resident
    # w2_ref:     (H, OUT_PAD), b2_ref: (1, OUT_PAD) VMEM resident
    # o_ref:      (TB, OUT_PAD)
    Lp1 = cls_ref.shape[1]

    # log-softmax of the tiny mixing vector on the scalar path, folded with
    # the leading `scalar` into per-layer coefficients:
    #   coef_l = scalar * (mix_l - logsumexp(mix))
    m = mix_ref[0]
    for l in range(1, Lp1):
        m = jnp.maximum(m, mix_ref[l])
    s = jnp.exp(mix_ref[0] - m)
    for l in range(1, Lp1):
        s = s + jnp.exp(mix_ref[l] - m)
    logz = m + jnp.log(s)
    sc = scalar_ref[0]
    coef = [sc * (mix_ref[l] - logz) for l in range(Lp1)]

    # Weighted sum over layers (VPU); static in-kernel slices of the layer
    # axis are free, and the scalar coefficient is applied in the same FMA.
    weighted = coef[0] * cls_ref[:, 0, :]
    for l in range(1, Lp1):
        weighted = weighted + coef[l] * cls_ref[:, l, :]

    # Two-layer MLP probe on the MXU (f32 accumulation).
    h = jnp.dot(weighted, w1_ref[...], preferred_element_type=jnp.float32) + b1_ref[...]
    h = jnp.maximum(h, 0.0)
    out = jnp.dot(h, w2_ref[...], preferred_element_type=jnp.float32) + b2_ref[...]
    o_ref[...] = out.astype(o_ref.dtype)


def probe_forward(cls_embs, mixing, scalar, w1, b1, w2, b2, *, tb=None,
                  vmem_limit_bytes=None):
    """cls_embs: (B, L+1, D_in) — native PyTorch axis convention (no transpose)."""
    B, Lp1, D_in = cls_embs.shape
    H = w1.shape[1]
    OUT = w2.shape[1]

    # Lane-dense output: pad OUT up to a multiple of 128 (unmasked vst).
    OUT_PAD = max(128, pl.cdiv(OUT, 128) * 128)
    if OUT_PAD != OUT:
        w2p = jnp.pad(w2, ((0, 0), (0, OUT_PAD - OUT)))
        b2p = jnp.pad(b2, ((0, OUT_PAD - OUT),))
    else:
        w2p, b2p = w2, b2

    # Batch tile: TB=256 default (fits v7x's 64 MiB VMEM, fills 256-wide MXU
    # rows); round up to a multiple of 8 so the (TB, OUT_PAD) output block is
    # always sublane-aligned.
    if tb is None:
        tb = 256 if B > 256 else B
    tb = max(8, pl.cdiv(tb, 8) * 8)
    nb = pl.cdiv(B, tb)
    B_pad = nb * tb
    cls_in = cls_embs
    if B_pad != B:
        cls_in = jnp.pad(cls_embs, ((0, B_pad - B), (0, 0), (0, 0)))

    itemsize = jnp.dtype(cls_in.dtype).itemsize
    if vmem_limit_bytes is None:
        est = (2 * tb * Lp1 * D_in * itemsize          # double-buffered cls tile
               + 2 * tb * OUT_PAD * 4                  # double-buffered out tile
               + (D_in * H + H + H * OUT_PAD + OUT_PAD) * 4  # resident weights
               + tb * max(H, D_in) * 4)                # intermediates headroom
        vmem_limit_bytes = min(max(int(est * 1.25) + (2 << 20), 32 << 20), 100 << 20)

    out = pl.pallas_call(
        probe_kernel,
        out_shape=jax.ShapeDtypeStruct((B_pad, OUT_PAD), jnp.float32),
        grid=(nb,),
        in_specs=[
            pl.BlockSpec(memory_space=pltpu.MemorySpace.SMEM),       # mixing
            pl.BlockSpec(memory_space=pltpu.MemorySpace.SMEM),       # scalar
            pl.BlockSpec((tb, Lp1, D_in), lambda i: (i, 0, 0)),      # cls tile
            pl.BlockSpec((D_in, H), lambda i: (0, 0)),               # w1 (resident)
            pl.BlockSpec((1, H), lambda i: (0, 0)),                  # b1 (resident)
            pl.BlockSpec((H, OUT_PAD), lambda i: (0, 0)),            # w2 (resident)
            pl.BlockSpec((1, OUT_PAD), lambda i: (0, 0)),            # b2 (resident)
        ],
        out_specs=pl.BlockSpec((tb, OUT_PAD), lambda i: (i, 0)),
        compiler_params=pltpu.CompilerParams(
            dimension_semantics=("parallel",),
            vmem_limit_bytes=vmem_limit_bytes,
        ),
    )(
        mixing,
        scalar,
        cls_in,
        w1,
        b1.reshape(1, H),
        w2p,
        b2p.reshape(1, OUT_PAD),
    )
    return out[:B, :OUT]


def probe_reference(cls_embs, mixing, scalar, w1, b1, w2, b2):
    logw = jax.nn.log_softmax(mixing)                        # (L+1,)
    weighted = scalar[0] * jnp.einsum("bld,l->bd", cls_embs, logw)
    h = jnp.maximum(weighted @ w1 + b1, 0.0)
    return h @ w2 + b2


if __name__ == "__main__":
    # Small shapes consistent with the module (module default D_in=H=1024).
    L, D_in, H, OUT = 4, 128, 128, 8
    Lp1 = L + 1

    key = jax.random.PRNGKey(0)
    k_cls, k_mix, k_sc, k_w1, k_b1, k_w2, k_b2 = jax.random.split(key, 7)

    mixing = jax.random.uniform(k_mix, (Lp1,), dtype=jnp.float32)   # torch.rand(L+1)
    scalar = jax.random.uniform(k_sc, (1,), dtype=jnp.float32)      # torch.rand(1)
    w1 = jax.random.normal(k_w1, (D_in, H), dtype=jnp.float32) * 0.02
    b1 = jax.random.normal(k_b1, (H,), dtype=jnp.float32) * 0.02
    w2 = jax.random.normal(k_w2, (H, OUT), dtype=jnp.float32) * 0.02
    b2 = jax.random.normal(k_b2, (OUT,), dtype=jnp.float32) * 0.02

    # Case 1: single batch tile.
    B1 = 8
    cls1 = jax.random.normal(k_cls, (B1, Lp1, D_in), dtype=jnp.float32)
    out1 = jax.block_until_ready(probe_forward(cls1, mixing, scalar, w1, b1, w2, b2))
    ref1 = probe_reference(cls1, mixing, scalar, w1, b1, w2, b2)
    assert out1.shape == (B1, OUT)
    assert jnp.allclose(out1, ref1, atol=1e-4, rtol=1e-4), "mismatch (single tile)"

    # Case 2: multi-block batch grid with padding (B=20, tb=8 -> grid=(3,)).
    B2 = 20
    cls2 = jax.random.normal(jax.random.PRNGKey(1), (B2, Lp1, D_in), dtype=jnp.float32)
    out2 = jax.block_until_ready(
        probe_forward(cls2, mixing, scalar, w1, b1, w2, b2, tb=8))
    ref2 = probe_reference(cls2, mixing, scalar, w1, b1, w2, b2)
    assert out2.shape == (B2, OUT)
    assert jnp.allclose(out2, ref2, atol=1e-4, rtol=1e-4), "mismatch (gridded)"

    print("KERNEL_OK")
</pallas_src>

<mosaic_0001>
module attributes {stable_mosaic.version = 11 : i64} {
  func.func @probe_kernel(%arg0: i32, %arg1: memref<5xf32, #tpu.memory_space<smem>>, %arg2: memref<1xf32, #tpu.memory_space<smem>>, %arg3: memref<8x5x128xf32, #tpu.memory_space<vmem>>, %arg4: memref<128x128xf32, #tpu.memory_space<vmem>>, %arg5: memref<1x128xf32, #tpu.memory_space<vmem>>, %arg6: memref<128x128xf32, #tpu.memory_space<vmem>>, %arg7: memref<1x128xf32, #tpu.memory_space<vmem>>, %arg8: memref<8x128xf32, #tpu.memory_space<vmem>>) attributes {dimension_semantics = [#tpu.dimension_semantics<parallel>], iteration_bounds = array<i64: 1>, scalar_prefetch = 0 : i64, scratch_operands = 0 : i64, tpu.core_type = #tpu.core_type<tc>, window_params = [{transform_indices = @transform_0, window_bounds = array<i64: 5>}, {transform_indices = @transform_1, window_bounds = array<i64: 1>}, {transform_indices = @transform_2, window_bounds = array<i64: 8, 5, 128>}, {pipeline_mode = #tpu.pipeline_mode<synchronous>, transform_indices = @transform_3, window_bounds = array<i64: 128, 128>}, {pipeline_mode = #tpu.pipeline_mode<synchronous>, transform_indices = @transform_4, window_bounds = array<i64: 1, 128>}, {pipeline_mode = #tpu.pipeline_mode<synchronous>, transform_indices = @transform_5, window_bounds = array<i64: 128, 128>}, {pipeline_mode = #tpu.pipeline_mode<synchronous>, transform_indices = @transform_6, window_bounds = array<i64: 1, 128>}, {transform_indices = @transform_7, window_bounds = array<i64: 8, 128>}]} {
    %c0 = arith.constant 0 : index
    %0 = memref.load %arg1[%c0] : memref<5xf32, #tpu.memory_space<smem>>
    %c1 = arith.constant 1 : index
    %1 = memref.load %arg1[%c1] : memref<5xf32, #tpu.memory_space<smem>>
    %2 = arith.maximumf %0, %1 : f32
    %c2 = arith.constant 2 : index
    %3 = memref.load %arg1[%c2] : memref<5xf32, #tpu.memory_space<smem>>
    %4 = arith.maximumf %2, %3 : f32
    %c3 = arith.constant 3 : index
    %5 = memref.load %arg1[%c3] : memref<5xf32, #tpu.memory_space<smem>>
    %6 = arith.maximumf %4, %5 : f32
    %c4 = arith.constant 4 : index
    %7 = memref.load %arg1[%c4] : memref<5xf32, #tpu.memory_space<smem>>
    %8 = arith.maximumf %6, %7 : f32
    %c0_0 = arith.constant 0 : index
    %9 = memref.load %arg1[%c0_0] : memref<5xf32, #tpu.memory_space<smem>>
    %10 = arith.subf %9, %8 : f32
    %11 = math.exp %10 : f32
    %c1_1 = arith.constant 1 : index
    %12 = memref.load %arg1[%c1_1] : memref<5xf32, #tpu.memory_space<smem>>
    %13 = arith.subf %12, %8 : f32
    %14 = math.exp %13 : f32
    %15 = arith.addf %11, %14 : f32
    %c2_2 = arith.constant 2 : index
    %16 = memref.load %arg1[%c2_2] : memref<5xf32, #tpu.memory_space<smem>>
    %17 = arith.subf %16, %8 : f32
    %18 = math.exp %17 : f32
    %19 = arith.addf %15, %18 : f32
    %c3_3 = arith.constant 3 : index
    %20 = memref.load %arg1[%c3_3] : memref<5xf32, #tpu.memory_space<smem>>
    %21 = arith.subf %20, %8 : f32
    %22 = math.exp %21 : f32
    %23 = arith.addf %19, %22 : f32
    %c4_4 = arith.constant 4 : index
    %24 = memref.load %arg1[%c4_4] : memref<5xf32, #tpu.memory_space<smem>>
    %25 = arith.subf %24, %8 : f32
    %26 = math.exp %25 : f32
    %27 = arith.addf %23, %26 : f32
    %28 = math.log %27 : f32
    %29 = arith.addf %8, %28 : f32
    %c0_5 = arith.constant 0 : index
    %30 = memref.load %arg2[%c0_5] : memref<1xf32, #tpu.memory_space<smem>>
    %c0_6 = arith.constant 0 : index
    %31 = memref.load %arg1[%c0_6] : memref<5xf32, #tpu.memory_space<smem>>
    %32 = arith.subf %31, %29 : f32
    %33 = arith.mulf %30, %32 : f32
    %c1_7 = arith.constant 1 : index
    %34 = memref.load %arg1[%c1_7] : memref<5xf32, #tpu.memory_space<smem>>
    %35 = arith.subf %34, %29 : f32
    %36 = arith.mulf %30, %35 : f32
    %c2_8 = arith.constant 2 : index
    %37 = memref.load %arg1[%c2_8] : memref<5xf32, #tpu.memory_space<smem>>
    %38 = arith.subf %37, %29 : f32
    %39 = arith.mulf %30, %38 : f32
    %c3_9 = arith.constant 3 : index
    %40 = memref.load %arg1[%c3_9] : memref<5xf32, #tpu.memory_space<smem>>
    %41 = arith.subf %40, %29 : f32
    %42 = arith.mulf %30, %41 : f32
    %c4_10 = arith.constant 4 : index
    %43 = memref.load %arg1[%c4_10] : memref<5xf32, #tpu.memory_space<smem>>
    %44 = arith.subf %43, %29 : f32
    %45 = arith.mulf %30, %44 : f32
    %c0_11 = arith.constant 0 : index
    %c0_12 = arith.constant 0 : index
    %c0_13 = arith.constant 0 : index
    %46 = vector.load %arg3[%c0_11, %c0_12, %c0_13] : memref<8x5x128xf32, #tpu.memory_space<vmem>>, vector<8x1x128xf32>
    %47 = vector.shape_cast %46 : vector<8x1x128xf32> to vector<8x128xf32>
    %48 = vector.broadcast %33 : f32 to vector<8x128xf32>
    %49 = arith.mulf %48, %47 : vector<8x128xf32>
    %c0_14 = arith.constant 0 : index
    %c1_15 = arith.constant 1 : index
    %c0_16 = arith.constant 0 : index
    %50 = vector.load %arg3[%c0_14, %c1_15, %c0_16] : memref<8x5x128xf32, #tpu.memory_space<vmem>>, vector<8x1x128xf32>
    %51 = vector.shape_cast %50 : vector<8x1x128xf32> to vector<8x128xf32>
    %52 = vector.broadcast %36 : f32 to vector<8x128xf32>
    %53 = arith.mulf %52, %51 : vector<8x128xf32>
    %54 = arith.addf %49, %53 : vector<8x128xf32>
    %c0_17 = arith.constant 0 : index
    %c2_18 = arith.constant 2 : index
    %c0_19 = arith.constant 0 : index
    %55 = vector.load %arg3[%c0_17, %c2_18, %c0_19] : memref<8x5x128xf32, #tpu.memory_space<vmem>>, vector<8x1x128xf32>
    %56 = vector.shape_cast %55 : vector<8x1x128xf32> to vector<8x128xf32>
    %57 = vector.broadcast %39 : f32 to vector<8x128xf32>
    %58 = arith.mulf %57, %56 : vector<8x128xf32>
    %59 = arith.addf %54, %58 : vector<8x128xf32>
    %c0_20 = arith.constant 0 : index
    %c3_21 = arith.constant 3 : index
    %c0_22 = arith.constant 0 : index
    %60 = vector.load %arg3[%c0_20, %c3_21, %c0_22] : memref<8x5x128xf32, #tpu.memory_space<vmem>>, vector<8x1x128xf32>
    %61 = vector.shape_cast %60 : vector<8x1x128xf32> to vector<8x128xf32>
    %62 = vector.broadcast %42 : f32 to vector<8x128xf32>
    %63 = arith.mulf %62, %61 : vector<8x128xf32>
    %64 = arith.addf %59, %63 : vector<8x128xf32>
    %c0_23 = arith.constant 0 : index
    %c4_24 = arith.constant 4 : index
    %c0_25 = arith.constant 0 : index
    %65 = vector.load %arg3[%c0_23, %c4_24, %c0_25] : memref<8x5x128xf32, #tpu.memory_space<vmem>>, vector<8x1x128xf32>
    %66 = vector.shape_cast %65 : vector<8x1x128xf32> to vector<8x128xf32>
    %67 = vector.broadcast %45 : f32 to vector<8x128xf32>
    %68 = arith.mulf %67, %66 : vector<8x128xf32>
    %69 = arith.addf %64, %68 : vector<8x128xf32>
    %c0_26 = arith.constant 0 : index
    %c0_27 = arith.constant 0 : index
    %70 = vector.load %arg4[%c0_26, %c0_27] : memref<128x128xf32, #tpu.memory_space<vmem>>, vector<128x128xf32>
    %cst = arith.constant dense<0.000000e+00> : vector<8x128xf32>
    %71 = tpu.matmul %69, %70, %cst {dimension_numbers = #tpu.dot_dimension_numbers<[1], [0], [0], [1], [0, 0, 1, 1], [], []>} : vector<8x128xf32>, vector<128x128xf32>, vector<8x128xf32> -> vector<8x128xf32>
    %c0_28 = arith.constant 0 : index
    %c0_29 = arith.constant 0 : index
    %72 = vector.load %arg5[%c0_28, %c0_29] : memref<1x128xf32, #tpu.memory_space<vmem>>, vector<1x128xf32>
    %73 = vector.broadcast %72 : vector<1x128xf32> to vector<8x128xf32>
    %74 = arith.addf %71, %73 : vector<8x128xf32>
    %cst_30 = arith.constant 0.000000e+00 : f32
    %75 = vector.broadcast %cst_30 : f32 to vector<8x128xf32>
    %76 = arith.maximumf %74, %75 : vector<8x128xf32>
    %c0_31 = arith.constant 0 : index
    %c0_32 = arith.constant 0 : index
    %77 = vector.load %arg6[%c0_31, %c0_32] : memref<128x128xf32, #tpu.memory_space<vmem>>, vector<128x128xf32>
    %cst_33 = arith.constant dense<0.000000e+00> : vector<8x128xf32>
    %78 = tpu.matmul %76, %77, %cst_33 {dimension_numbers = #tpu.dot_dimension_numbers<[1], [0], [0], [1], [0, 0, 1, 1], [], []>} : vector<8x128xf32>, vector<128x128xf32>, vector<8x128xf32> -> vector<8x128xf32>
    %c0_34 = arith.constant 0 : index
    %c0_35 = arith.constant 0 : index
    %79 = vector.load %arg7[%c0_34, %c0_35] : memref<1x128xf32, #tpu.memory_space<vmem>>, vector<1x128xf32>
    %80 = vector.broadcast %79 : vector<1x128xf32> to vector<8x128xf32>
    %81 = arith.addf %78, %80 : vector<8x128xf32>
    %c0_36 = arith.constant 0 : index
    %c0_37 = arith.constant 0 : index
    %82 = vector.load %arg8[%c0_36, %c0_37] : memref<8x128xf32, #tpu.memory_space<vmem>>, vector<8x128xf32>
    tpu.vector_store %arg8[%c0_36, %c0_37], %81 {strides = array<i32>} : memref<8x128xf32, #tpu.memory_space<vmem>>, vector<8x128xf32>,
    return
  }
  func.func @transform_0(%arg0: i32) -> i32 {
    %c0_i32 = arith.constant 0 : i32
    %c0_i32_0 = arith.constant 0 : i32
    return %c0_i32 : i32
  }
  func.func @transform_1(%arg0: i32) -> i32 {
    %c0_i32 = arith.constant 0 : i32
    %c0_i32_0 = arith.constant 0 : i32
    return %c0_i32 : i32
  }
  func.func @transform_2(%arg0: i32) -> (i32, i32, i32) {
    %c0_i32 = arith.constant 0 : i32
    %c0_i32_0 = arith.constant 0 : i32
    %c0_i32_1 = arith.constant 0 : i32
    return %arg0, %c0_i32, %c0_i32_0 : i32, i32, i32
  }
  func.func @transform_3(%arg0: i32) -> (i32, i32) {
    %c0_i32 = arith.constant 0 : i32
    %c0_i32_0 = arith.constant 0 : i32
    %c0_i32_1 = arith.constant 0 : i32
    return %c0_i32, %c0_i32_0 : i32, i32
  }
  func.func @transform_4(%arg0: i32) -> (i32, i32) {
    %c0_i32 = arith.constant 0 : i32
    %c0_i32_0 = arith.constant 0 : i32
    %c0_i32_1 = arith.constant 0 : i32
    return %c0_i32, %c0_i32_0 : i32, i32
  }
  func.func @transform_5(%arg0: i32) -> (i32, i32) {
    %c0_i32 = arith.constant 0 : i32
    %c0_i32_0 = arith.constant 0 : i32
    %c0_i32_1 = arith.constant 0 : i32
    return %c0_i32, %c0_i32_0 : i32, i32
  }
  func.func @transform_6(%arg0: i32) -> (i32, i32) {
    %c0_i32 = arith.constant 0 : i32
    %c0_i32_0 = arith.constant 0 : i32
    %c0_i32_1 = arith.constant 0 : i32
    return %c0_i32, %c0_i32_0 : i32, i32
  }
  func.func @transform_7(%arg0: i32) -> (i32, i32) {
    %c0_i32 = arith.constant 0 : i32
    %c0_i32_0 = arith.constant 0 : i32
    return %arg0, %c0_i32 : i32, i32
  }
}

</mosaic_0001>

<llo_original>
// kernel: tpu_custom_call.1
$region0: #{tpu_custom_call.1}
  #allocation0 [shape = 'u32[]', space=smem, size = 0x4, offset = 0x4, fixed_abs, tag = 'smem constant byte address 0x4 - core index']
  #allocation1 [shape = 'u32[144,128]{1,0:T(1,128)}', space=vmem, size = 0x12000, scoped, tag = 'internal scratch']
  #allocation2 [shape = 'f32[1]{0:T(128)S(6)}', space=smem, size = 0x200, scoped, tag = 'scoped memory for tpu_custom_call.1']
  %s0 = inlined_call_operand.vmem [shape: f32[5], index: 0, kind: input, shape index: {}]
  %s1 = inlined_call_operand.<no memory space> [shape: f32[1], index: 1, kind: input, shape index: {}]
  %s2 = inlined_call_operand.vmem [shape: f32[8,5,128], index: 2, kind: input, shape index: {}]
  %s3 = inlined_call_operand.hbm [shape: f32[128,128], index: 3, kind: input, shape index: {}]
  %s4 = inlined_call_operand.vmem [shape: f32[1,128], index: 4, kind: input, shape index: {}]
  %s5 = inlined_call_operand.hbm [shape: f32[128,128], index: 5, kind: input, shape index: {}]
  %s6 = inlined_call_operand.vmem [shape: f32[1,128], index: 6, kind: input, shape index: {}]
  %s7 = inlined_call_operand.hbm [shape: f32[8,128], index: 7, kind: output, shape index: {}]
  %s8 = sld [smem:[#allocation0]]
  $region50: #{tpu_custom_call.1} parent=0
    _
  %s10 = ssub.s32 1, %s8
  %s11 = scalar_select 0, %s10, %s8
  %12 = sst [smem:[#allocation2]] %s1
  $region1: #{tpu_custom_call.1} parent=0
    #allocation3 [shape = 'u8[512]{0}', space=smem, size = 0x200, scoped, tag = 'input window, operand 0, single buffered']
    #allocation4 [shape = 's32[1]{0}', space=sflag, size = 0x4, scoped, tag = 'scoped memory for tpu_custom_call.1']
    #allocation5 [shape = 's32[1]{0}', space=sflag, size = 0x4, scoped, tag = 'scoped memory for tpu_custom_call.1']
    #allocation6 [shape = 's32[1]{0}', space=sflag, size = 0x4, scoped, tag = 'scoped memory for tpu_custom_call.1']
    #allocation7 [shape = 'u8[65536]{0}', space=vmem, size = 0x10000, scoped, tag = 'input window, operand 3, single buffered']
    #allocation8 [shape = 'u8[65536]{0}', space=vmem, size = 0x10000, scoped, tag = 'input window, operand 5, single buffered']
    #allocation9 [shape = 's32[1]{0}', space=sflag, size = 0x4, scoped, tag = 'scoped memory for tpu_custom_call.1']
    #allocation10 [shape = 'u8[4096]{0}', space=vmem, size = 0x1000, scoped, tag = 'output window, operand 0, single buffered']
    %13 = vsyncpa [#allocation6], 0
    %14 = vsyncpa [#allocation4], 0
    %15 = vsyncpa [#allocation9], 0
    %16 = vsyncpa [#allocation5], 0
    // Predicated region
    $region2: #{tpu_custom_call.1} parent=1 // pred_check
      _
    $region3: #{tpu_custom_call.1} parent=1 // pred_check_branch
      %18 = sbr.rel (0) target = $region5
    $region4: #{tpu_custom_call.1} parent=1 // pred_region
      %s20 = ssub.s32 16, 16
      %21 = vsyncadd [#allocation6], %s20
      %s23 = sshll.u32 %s0, 4
      %s24 = int_to_ptr.vmem [resolvable:$true] %s23
      %26 = dma.vmem_to_smem %s24, 16, [#allocation3], [#allocation6]
    $region5: #{tpu_custom_call.1} parent=1 // pred_fallthru
      _
    // Predicated region
    $region6: #{tpu_custom_call.1} parent=1 // pred_check
      _
    $region7: #{tpu_custom_call.1} parent=1 // pred_check_branch
      %28 = sbr.rel (0) target = $region9
    $region8: #{tpu_custom_call.1} parent=1 // pred_region
      _
    $region9: #{tpu_custom_call.1} parent=1 // pred_fallthru
      _
    // Predicated region
    $region10: #{tpu_custom_call.1} parent=1 // pred_check
      _
    $region11: #{tpu_custom_call.1} parent=1 // pred_check_branch
      %30 = sbr.rel (0) target = $region13
    $region12: #{tpu_custom_call.1} parent=1 // pred_region
      _
    $region13: #{tpu_custom_call.1} parent=1 // pred_fallthru
      _
    // Predicated region
    $region14: #{tpu_custom_call.1} parent=1 // pred_check
      _
    $region15: #{tpu_custom_call.1} parent=1 // pred_check_branch
      %32 = sbr.rel (0) target = $region17
    $region16: #{tpu_custom_call.1} parent=1 // pred_region
      %s34 = ssub.s32 2048, 2048
      %35 = vsyncadd [#allocation4], %s34
      %s36 = sshll.u32 [#allocation7], 4
      %s37 = int_to_ptr.vmem [resolvable:$true] %s36
      %42 = dma.hbm_to_vmem [thread:$0]  %s3, 2048, %s37, [#allocation4], 128, 128, 8
    $region17: #{tpu_custom_call.1} parent=1 // pred_fallthru
      _
    // Predicated region
    $region18: #{tpu_custom_call.1} parent=1 // pred_check
      _
    $region19: #{tpu_custom_call.1} parent=1 // pred_check_branch
      %44 = sbr.rel (0) target = $region21
    $region20: #{tpu_custom_call.1} parent=1 // pred_region
      _
    $region21: #{tpu_custom_call.1} parent=1 // pred_fallthru
      _
    // Predicated region
    $region22: #{tpu_custom_call.1} parent=1 // pred_check
      _
    $region23: #{tpu_custom_call.1} parent=1 // pred_check_branch
      %46 = sbr.rel (0) target = $region25
    $region24: #{tpu_custom_call.1} parent=1 // pred_region
      %s48 = ssub.s32 2048, 2048
      %49 = vsyncadd [#allocation9], %s48
      %s50 = sshll.u32 [#allocation8], 4
      %s51 = int_to_ptr.vmem [resolvable:$true] %s50
      %56 = dma.hbm_to_vmem [thread:$0]  %s5, 2048, %s51, [#allocation9], 128, 128, 8
    $region25: #{tpu_custom_call.1} parent=1 // pred_fallthru
      _
    // Predicated region
    $region26: #{tpu_custom_call.1} parent=1 // pred_check
      _
    $region27: #{tpu_custom_call.1} parent=1 // pred_check_branch
      %58 = sbr.rel (0) target = $region29
    $region28: #{tpu_custom_call.1} parent=1 // pred_region
      _
    $region29: #{tpu_custom_call.1} parent=1 // pred_fallthru
      _
    // Predicated region
    $region30: #{tpu_custom_call.1} parent=1 // pred_check
      _
    $region31: #{tpu_custom_call.1} parent=1 // pred_check_branch
      %60 = sbr.rel (0) target = $region33
    $region32: #{tpu_custom_call.1} parent=1 // pred_region
      %61 = dma.done [#allocation6], 16
    $region33: #{tpu_custom_call.1} parent=1 // pred_fallthru
      _
    // Predicated region
    $region34: #{tpu_custom_call.1} parent=1 // pred_check
      _
    $region35: #{tpu_custom_call.1} parent=1 // pred_check_branch
      %63 = sbr.rel (0) target = $region37
    $region36: #{tpu_custom_call.1} parent=1 // pred_region
      %64 = dma.done [#allocation4], 2048
    $region37: #{tpu_custom_call.1} parent=1 // pred_fallthru
      _
    // Predicated region
    $region38: #{tpu_custom_call.1} parent=1 // pred_check
      _
    $region39: #{tpu_custom_call.1} parent=1 // pred_check_branch
      %66 = sbr.rel (0) target = $region41
    $region40: #{tpu_custom_call.1} parent=1 // pred_region
      %67 = dma.done [#allocation9], 2048
    $region41: #{tpu_custom_call.1} parent=1 // pred_fallthru
      _
    %68 = sfence
    %s69 = sld [smem:[#allocation3]]
    %s70 = sld [smem:[#allocation3 + $0x1]]
    %s71 = smax.f32 %s69, %s70
    %s72 = sld [smem:[#allocation3 + $0x2]]
    %s73 = smax.f32 %s71, %s72
    %s74 = sld [smem:[#allocation3 + $0x3]]
    %s75 = smax.f32 %s73, %s74
    %s76 = sld [smem:[#allocation3 + $0x4]]
    %s77 = smax.f32 %s75, %s76
    %s78 = ssub.f32 %s69, %s77
    %v79 = vstv %s78
    %v80 = vmul.f32 %v79, 1.442695
    %v81 = vpow.pop %v80
    %s82 = vtos %v81
    %s83 = ssub.f32 %s70, %s77
    %v84 = vstv %s83
    %v85 = vmul.f32 %v84, 1.442695
    %v86 = vpow.pop %v85
    %s87 = vtos %v86
    %s88 = sadd.f32 %s82, %s87
    %s89 = ssub.f32 %s72, %s77
    %v90 = vstv %s89
    %v91 = vmul.f32 %v90, 1.442695
    %v92 = vpow.pop %v91
    %s93 = vtos %v92
    %s94 = sadd.f32 %s88, %s93
    %s95 = ssub.f32 %s74, %s77
    %v96 = vstv %s95
    %v97 = vmul.f32 %v96, 1.442695
    %v98 = vpow.pop %v97
    %s99 = vtos %v98
    %s100 = sadd.f32 %s94, %s99
    %s101 = ssub.f32 %s76, %s77
    %v102 = vstv %s101
    %v103 = vmul.f32 %v102, 1.442695
    %v104 = vpow.pop %v103
    %s105 = vtos %v104
    %s106 = sadd.f32 %s100, %s105
    %v107 = vstv %s106
    %v108 = vlog2.pop %v107
    %v109 = vmul.f32 %v108, 0.6931472
    %s110 = vtos %v109
    %s111 = sadd.f32 %s77, %s110
    %s112 = sld [smem:[#allocation2]]
    %s113 = ssub.f32 %s69, %s111
    %s114 = smul.f32 %s112, %s113
    %s115 = ssub.f32 %s70, %s111
    %s116 = smul.f32 %s112, %s115
    %s117 = ssub.f32 %s72, %s111
    %s118 = smul.f32 %s112, %s117
    %s119 = ssub.f32 %s74, %s111
    %s120 = smul.f32 %s112, %s119
    %s121 = ssub.f32 %s76, %s111
    %s122 = smul.f32 %s112, %s121
    %v123 = vld [vmem:[%s2] sm:$0x1]
    %v124 = vld [vmem:[%s2 + $0x8] sm:$0x1]
    %v125 = vld [vmem:[%s2 + $0x10] sm:$0x1]
    %v126 = vld [vmem:[%s2 + $0x18] sm:$0x1]
    %v127 = vld [vmem:[%s2 + $0x20] sm:$0x1]
    %v128 = vld [vmem:[%s2 + $0x28] sm:$0x1]
    %v129 = vld [vmem:[%s2 + $0x30] sm:$0x1]
    %v130 = vld [vmem:[%s2 + $0x38] sm:$0x1]
    %v131 = vstv %s114
    %v132 = vmul.f32 %v131, %v123
    %v133 = vmul.f32 %v131, %v124
    %v134 = vmul.f32 %v131, %v125
    %v135 = vmul.f32 %v131, %v126
    %v136 = vmul.f32 %v131, %v127
    %v137 = vmul.f32 %v131, %v128
    %v138 = vmul.f32 %v131, %v129
    %v139 = vmul.f32 %v131, %v130
    %v140 = vld [vmem:[%s2 + $0x1] sm:$0x1]
    %v141 = vld [vmem:[%s2 + $0x9] sm:$0x1]
    %v142 = vld [vmem:[%s2 + $0x11] sm:$0x1]
    %v143 = vld [vmem:[%s2 + $0x19] sm:$0x1]
    %v144 = vld [vmem:[%s2 + $0x21] sm:$0x1]
    %v145 = vld [vmem:[%s2 + $0x29] sm:$0x1]
    %v146 = vld [vmem:[%s2 + $0x31] sm:$0x1]
    %v147 = vld [vmem:[%s2 + $0x39] sm:$0x1]
    %v148 = vstv %s116
    %v149 = vmul.f32 %v148, %v140
    %v150 = vmul.f32 %v148, %v141
    %v151 = vmul.f32 %v148, %v142
    %v152 = vmul.f32 %v148, %v143
    %v153 = vmul.f32 %v148, %v144
    %v154 = vmul.f32 %v148, %v145
    %v155 = vmul.f32 %v148, %v146
    %v156 = vmul.f32 %v148, %v147
    %v157 = vadd.f32 %v132, %v149
    %v158 = vadd.f32 %v133, %v150
    %v159 = vadd.f32 %v134, %v151
    %v160 = vadd.f32 %v135, %v152
    %v161 = vadd.f32 %v136, %v153
    %v162 = vadd.f32 %v137, %v154
    %v163 = vadd.f32 %v138, %v155
    %v164 = vadd.f32 %v139, %v156
    %v165 = vld [vmem:[%s2 + $0x2] sm:$0x1]
    %v166 = vld [vmem:[%s2 + $0xa] sm:$0x1]
    %v167 = vld [vmem:[%s2 + $0x12] sm:$0x1]
    %v168 = vld [vmem:[%s2 + $0x1a] sm:$0x1]
    %v169 = vld [vmem:[%s2 + $0x22] sm:$0x1]
    %v170 = vld [vmem:[%s2 + $0x2a] sm:$0x1]
    %v171 = vld [vmem:[%s2 + $0x32] sm:$0x1]
    %v172 = vld [vmem:[%s2 + $0x3a] sm:$0x1]
    %v173 = vstv %s118
    %v174 = vmul.f32 %v173, %v165
    %v175 = vmul.f32 %v173, %v166
    %v176 = vmul.f32 %v173, %v167
    %v177 = vmul.f32 %v173, %v168
    %v178 = vmul.f32 %v173, %v169
    %v179 = vmul.f32 %v173, %v170
    %v180 = vmul.f32 %v173, %v171
    %v181 = vmul.f32 %v173, %v172
    %v182 = vadd.f32 %v157, %v174
    %v183 = vadd.f32 %v158, %v175
    %v184 = vadd.f32 %v159, %v176
    %v185 = vadd.f32 %v160, %v177
    %v186 = vadd.f32 %v161, %v178
    %v187 = vadd.f32 %v162, %v179
    %v188 = vadd.f32 %v163, %v180
    %v189 = vadd.f32 %v164, %v181
    %v190 = vld [vmem:[%s2 + $0x3] sm:$0x1]
    %v191 = vld [vmem:[%s2 + $0xb] sm:$0x1]
    %v192 = vld [vmem:[%s2 + $0x13] sm:$0x1]
    %v193 = vld [vmem:[%s2 + $0x1b] sm:$0x1]
    %v194 = vld [vmem:[%s2 + $0x23] sm:$0x1]
    %v195 = vld [vmem:[%s2 + $0x2b] sm:$0x1]
    %v196 = vld [vmem:[%s2 + $0x33] sm:$0x1]
    %v197 = vld [vmem:[%s2 + $0x3b] sm:$0x1]
    %v198 = vstv %s120
    %v199 = vmul.f32 %v198, %v190
    %v200 = vmul.f32 %v198, %v191
    %v201 = vmul.f32 %v198, %v192
    %v202 = vmul.f32 %v198, %v193
    %v203 = vmul.f32 %v198, %v194
    %v204 = vmul.f32 %v198, %v195
    %v205 = vmul.f32 %v198, %v196
    %v206 = vmul.f32 %v198, %v197
    %v207 = vadd.f32 %v182, %v199
    %v208 = vadd.f32 %v183, %v200
    %v209 = vadd.f32 %v184, %v201
    %v210 = vadd.f32 %v185, %v202
    %v211 = vadd.f32 %v186, %v203
    %v212 = vadd.f32 %v187, %v204
    %v213 = vadd.f32 %v188, %v205
    %v214 = vadd.f32 %v189, %v206
    %v215 = vld [vmem:[%s2 + $0x4] sm:$0x1]
    %v216 = vld [vmem:[%s2 + $0xc] sm:$0x1]
    %v217 = vld [vmem:[%s2 + $0x14] sm:$0x1]
    %v218 = vld [vmem:[%s2 + $0x1c] sm:$0x1]
    %v219 = vld [vmem:[%s2 + $0x24] sm:$0x1]
    %v220 = vld [vmem:[%s2 + $0x2c] sm:$0x1]
    %v221 = vld [vmem:[%s2 + $0x34] sm:$0x1]
    %v222 = vld [vmem:[%s2 + $0x3c] sm:$0x1]
    %v223 = vstv %s122
    %v224 = vmul.f32 %v223, %v215
    %v225 = vmul.f32 %v223, %v216
    %v226 = vmul.f32 %v223, %v217
    %v227 = vmul.f32 %v223, %v218
    %v228 = vmul.f32 %v223, %v219
    %v229 = vmul.f32 %v223, %v220
    %v230 = vmul.f32 %v223, %v221
    %v231 = vmul.f32 %v223, %v222
    %v232 = vadd.f32 %v207, %v224
    %v233 = vadd.f32 %v208, %v225
    %v234 = vadd.f32 %v209, %v226
    %v235 = vadd.f32 %v210, %v227
    %v236 = vadd.f32 %v211, %v228
    %v237 = vadd.f32 %v212, %v229
    %v238 = vadd.f32 %v213, %v230
    %v239 = vadd.f32 %v214, %v231
    %v240 = vld [vmem:[#allocation7] sm:$0xff]
    %v241 = vld [vmem:[#allocation7 + $0x8] sm:$0xff]
    %v242 = vld [vmem:[#allocation7 + $0x10] sm:$0xff]
    %v243 = vld [vmem:[#allocation7 + $0x18] sm:$0xff]
    %v244 = vld [vmem:[#allocation7 + $0x20] sm:$0xff]
    %v245 = vld [vmem:[#allocation7 + $0x28] sm:$0xff]
    %v246 = vld [vmem:[#allocation7 + $0x30] sm:$0xff]
    %v247 = vld [vmem:[#allocation7 + $0x38] sm:$0xff]
    %v248 = vld [vmem:[#allocation7 + $0x40] sm:$0xff]
    %v249 = vld [vmem:[#allocation7 + $0x48] sm:$0xff]
    %v250 = vld [vmem:[#allocation7 + $0x50] sm:$0xff]
    %v251 = vld [vmem:[#allocation7 + $0x58] sm:$0xff]
    %v252 = vld [vmem:[#allocation7 + $0x60] sm:$0xff]
    %v253 = vld [vmem:[#allocation7 + $0x68] sm:$0xff]
    %v254 = vld [vmem:[#allocation7 + $0x70] sm:$0xff]
    %v255 = vld [vmem:[#allocation7 + $0x78] sm:$0xff]
    %v256 = vld [vmem:[%s4] sm:$0x1]
    %v258 = vlaneseq
    %v259 = vshrl.u32 %v258, 7
    %v260 = vsub.s32 0, %v259
    %v261 = vrot.slane %v256, %v260
    %v271 = vrot.slane %v233, 7
    %vm272 = vcmask 1041409
    %v273 = vsel %vm272, %v271, %v232
    %v274 = vrot.slane %v234, 6
    %vm275 = vcmask 1042434
    %v276 = vsel %vm275, %v274, %v273
    %v277 = vrot.slane %v235, 5
    %vm278 = vcmask 1043459
    %v279 = vsel %vm278, %v277, %v276
    %v280 = vrot.slane %v236, 4
    %vm281 = vcmask 1044484
    %v282 = vsel %vm281, %v280, %v279
    %v283 = vrot.slane %v237, 3
    %vm284 = vcmask 1045509
    %v285 = vsel %vm284, %v283, %v282
    %v286 = vrot.slane %v238, 2
    %vm287 = vcmask 1046534
    %v288 = vsel %vm287, %v286, %v285
    %v289 = vrot.slane %v239, 1
    %vm290 = vcmask 1047559
    %v291 = vsel %vm290, %v289, %v288
    %293 = vmatprep.subr.mxu0 0.0
    %294 = vmatpush1.msra.mxu0 %v255
    %295 = vmatprep.subr.mxu0 0.0
    %296 = vmatpush1.msra.mxu0 %v254
    %297 = vmatprep.subr.mxu0 0.0
    %298 = vmatpush1.msra.mxu0 %v253
    %299 = vmatprep.subr.mxu0 0.0
    %300 = vmatpush1.msra.mxu0 %v252
    %301 = vmatprep.subr.mxu0 0.0
    %302 = vmatpush1.msra.mxu0 %v251
    %303 = vmatprep.subr.mxu0 0.0
    %304 = vmatpush1.msra.mxu0 %v250
    %305 = vmatprep.subr.mxu0 0.0
    %306 = vmatpush1.msra.mxu0 %v249
    %307 = vmatprep.subr.mxu0 0.0
    %308 = vmatpush1.msra.mxu0 %v248
    %309 = vmatprep.subr.mxu0 0.0
    %310 = vmatpush1.msra.mxu0 %v247
    %311 = vmatprep.subr.mxu0 0.0
    %312 = vmatpush1.msra.mxu0 %v246
    %313 = vmatprep.subr.mxu0 0.0
    %314 = vmatpush1.msra.mxu0 %v245
    %315 = vmatprep.subr.mxu0 0.0
    %316 = vmatpush1.msra.mxu0 %v244
    %317 = vmatprep.subr.mxu0 0.0
    %318 = vmatpush1.msra.mxu0 %v243
    %319 = vmatprep.subr.mxu0 0.0
    %320 = vmatpush1.msra.mxu0 %v242
    %321 = vmatprep.subr.mxu0 0.0
    %322 = vmatpush1.msra.mxu0 %v241
    %323 = vmatprep.subr.mxu0 0.0
    %324 = vmatpush1.msra.mxu0 %v240
    %325 = vmatprep.subr.mxu0 0.0
    %326 = vmatpush2.msra.mxu0 0.0
    %327 = vmatprep.subr.mxu0 0.0
    %328 = vmatpush2.msra.mxu0 0.0
    %329 = vmatprep.subr.mxu0 0.0
    %330 = vmatpush2.msra.mxu0 0.0
    %331 = vmatprep.subr.mxu0 0.0
    %332 = vmatpush2.msra.mxu0 0.0
    %333 = vmatprep.subr.mxu0 0.0
    %334 = vmatpush2.msra.mxu0 0.0
    %335 = vmatprep.subr.mxu0 0.0
    %336 = vmatpush2.msra.mxu0 0.0
    %337 = vmatprep.subr.mxu0 0.0
    %338 = vmatpush2.msra.mxu0 0.0
    %339 = vmatprep.subr.mxu0 0.0
    %340 = vmatpush2.msra.mxu0 0.0
    %341 = vmatprep.subr.mxu0 0.0
    %342 = vmatpush2.msra.mxu0 0.0
    %343 = vmatprep.subr.mxu0 0.0
    %344 = vmatpush2.msra.mxu0 0.0
    %345 = vmatprep.subr.mxu0 0.0
    %346 = vmatpush2.msra.mxu0 0.0
    %347 = vmatprep.subr.mxu0 0.0
    %348 = vmatpush2.msra.mxu0 0.0
    %349 = vmatprep.subr.mxu0 0.0
    %350 = vmatpush2.msra.mxu0 0.0
    %351 = vmatprep.subr.mxu0 0.0
    %352 = vmatpush2.msra.mxu0 0.0
    %353 = vmatprep.subr.mxu0 0.0
    %354 = vmatpush2.msra.mxu0 0.0
    %355 = vmatprep.subr.mxu0 0.0
    %356 = vmatpush2.msra.mxu0 0.0
    %357 = vmatprep.mubr.f32.mxu0 0.0
    %358 = vmatmul.mubr.f32.gmra.mxu0 %v291
    %v359 = vpop.f32.mrf.mxu0
    %v360 = vadd.f32 %v261, %v359
    %v361 = vpop.f32.mrf.mxu0
    %362 = vdwg.mxu0
    %v363 = vmax.f32 %v360, 0.0
    %v364 = vld [vmem:[#allocation8] sm:$0xff]
    %v365 = vld [vmem:[#allocation8 + $0x8] sm:$0xff]
    %v366 = vld [vmem:[#allocation8 + $0x10] sm:$0xff]
    %v367 = vld [vmem:[#allocation8 + $0x18] sm:$0xff]
    %v368 = vld [vmem:[#allocation8 + $0x20] sm:$0xff]
    %v369 = vld [vmem:[#allocation8 + $0x28] sm:$0xff]
    %v370 = vld [vmem:[#allocation8 + $0x30] sm:$0xff]
    %v371 = vld [vmem:[#allocation8 + $0x38] sm:$0xff]
    %v372 = vld [vmem:[#allocation8 + $0x40] sm:$0xff]
    %v373 = vld [vmem:[#allocation8 + $0x48] sm:$0xff]
    %v374 = vld [vmem:[#allocation8 + $0x50] sm:$0xff]
    %v375 = vld [vmem:[#allocation8 + $0x58] sm:$0xff]
    %v376 = vld [vmem:[#allocation8 + $0x60] sm:$0xff]
    %v377 = vld [vmem:[#allocation8 + $0x68] sm:$0xff]
    %v378 = vld [vmem:[#allocation8 + $0x70] sm:$0xff]
    %v379 = vld [vmem:[#allocation8 + $0x78] sm:$0xff]
    %v380 = vld [vmem:[%s6] sm:$0x1]
    %v382 = vlaneseq
    %v383 = vshrl.u32 %v382, 7
    %v384 = vsub.s32 0, %v383
    %v385 = vrot.slane %v380, %v384
    %387 = vmatprep.subr.mxu0 0.0
    %388 = vmatpush1.msra.mxu0 %v379
    %389 = vmatprep.subr.mxu0 0.0
    %390 = vmatpush1.msra.mxu0 %v378
    %391 = vmatprep.subr.mxu0 0.0
    %392 = vmatpush1.msra.mxu0 %v377
    %393 = vmatprep.subr.mxu0 0.0
    %394 = vmatpush1.msra.mxu0 %v376
    %395 = vmatprep.subr.mxu0 0.0
    %396 = vmatpush1.msra.mxu0 %v375
    %397 = vmatprep.subr.mxu0 0.0
    %398 = vmatpush1.msra.mxu0 %v374
    %399 = vmatprep.subr.mxu0 0.0
    %400 = vmatpush1.msra.mxu0 %v373
    %401 = vmatprep.subr.mxu0 0.0
    %402 = vmatpush1.msra.mxu0 %v372
    %403 = vmatprep.subr.mxu0 0.0
    %404 = vmatpush1.msra.mxu0 %v371
    %405 = vmatprep.subr.mxu0 0.0
    %406 = vmatpush1.msra.mxu0 %v370
    %407 = vmatprep.subr.mxu0 0.0
    %408 = vmatpush1.msra.mxu0 %v369
    %409 = vmatprep.subr.mxu0 0.0
    %410 = vmatpush1.msra.mxu0 %v368
    %411 = vmatprep.subr.mxu0 0.0
    %412 = vmatpush1.msra.mxu0 %v367
    %413 = vmatprep.subr.mxu0 0.0
    %414 = vmatpush1.msra.mxu0 %v366
    %415 = vmatprep.subr.mxu0 0.0
    %416 = vmatpush1.msra.mxu0 %v365
    %417 = vmatprep.subr.mxu0 0.0
    %418 = vmatpush1.msra.mxu0 %v364
    %419 = vmatprep.subr.mxu0 0.0
    %420 = vmatpush2.msra.mxu0 0.0
    %421 = vmatprep.subr.mxu0 0.0
    %422 = vmatpush2.msra.mxu0 0.0
    %423 = vmatprep.subr.mxu0 0.0
    %424 = vmatpush2.msra.mxu0 0.0
    %425 = vmatprep.subr.mxu0 0.0
    %426 = vmatpush2.msra.mxu0 0.0
    %427 = vmatprep.subr.mxu0 0.0
    %428 = vmatpush2.msra.mxu0 0.0
    %429 = vmatprep.subr.mxu0 0.0
    %430 = vmatpush2.msra.mxu0 0.0
    %431 = vmatprep.subr.mxu0 0.0
    %432 = vmatpush2.msra.mxu0 0.0
    %433 = vmatprep.subr.mxu0 0.0
    %434 = vmatpush2.msra.mxu0 0.0
    %435 = vmatprep.subr.mxu0 0.0
    %436 = vmatpush2.msra.mxu0 0.0
    %437 = vmatprep.subr.mxu0 0.0
    %438 = vmatpush2.msra.mxu0 0.0
    %439 = vmatprep.subr.mxu0 0.0
    %440 = vmatpush2.msra.mxu0 0.0
    %441 = vmatprep.subr.mxu0 0.0
    %442 = vmatpush2.msra.mxu0 0.0
    %443 = vmatprep.subr.mxu0 0.0
    %444 = vmatpush2.msra.mxu0 0.0
    %445 = vmatprep.subr.mxu0 0.0
    %446 = vmatpush2.msra.mxu0 0.0
    %447 = vmatprep.subr.mxu0 0.0
    %448 = vmatpush2.msra.mxu0 0.0
    %449 = vmatprep.subr.mxu0 0.0
    %450 = vmatpush2.msra.mxu0 0.0
    %451 = vmatprep.mubr.f32.mxu0 0.0
    %452 = vmatmul.mubr.f32.gmra.mxu0 %v363
    %v453 = vpop.f32.mrf.mxu0
    %v454 = vadd.f32 %v385, %v453
    %v455 = vpop.f32.mrf.mxu0
    %456 = vdwg.mxu0
    %457 = vst [vmem:[#allocation10] sm:$0xff] %v454
    // Predicated region
    $region42: #{tpu_custom_call.1} parent=1 // pred_check
      _
    $region43: #{tpu_custom_call.1} parent=1 // pred_check_branch
      %459 = sbr.rel (0) target = $region45
    $region44: #{tpu_custom_call.1} parent=1 // pred_region
      %s461 = ssub.s32 128, 128
      %462 = vsyncadd [#allocation5], %s461
      %s464 = sshll.u32 [#allocation10], 4
      %s465 = int_to_ptr.vmem [resolvable:$true] %s464
      %467 = dma.vmem_to_hbm [thread:$0]  %s465, 128, %s7, [#allocation5]
    $region45: #{tpu_custom_call.1} parent=1 // pred_fallthru
      _
    // Predicated region
    $region46: #{tpu_custom_call.1} parent=1 // pred_check
      _
    $region47: #{tpu_custom_call.1} parent=1 // pred_check_branch
      %469 = sbr.rel (0) target = $region49
    $region48: #{tpu_custom_call.1} parent=1 // pred_region
      %470 = dma.done [#allocation5], 128
    $region49: #{tpu_custom_call.1} parent=1 // pred_fallthru
      _
    %471 = vsyncpa [#allocation4], 1
    %472 = vsyncpa [#allocation9], 1
    %473 = vsyncpa [#allocation5], 1
    %474 = vsyncpa [#allocation6], 1

</llo_original>
